<compile_context>
chip_gen: v7x
topology: tpu7x:2x2x1
jax: 0.10.0
libtpu: 0.0.40
codegen_flags: <defaults>
</compile_context>

<pallas_src>
import jax
import jax.numpy as jnp
from jax.experimental import pallas as pl
from jax.experimental.pallas import tpu as pltpu

_LANE = 128  # TPU vreg lane width


def _mlp_kernel(xT_ref, w1_ref, b1_ref, w2_ref, b2_ref, w3_ref, b3_ref, oT_ref):
    xT = xT_ref[...]                                                     # (4,  T)
    # fc1 + relu   (16,4) @ (4,T) -> (16,T)
    h1 = jnp.dot(w1_ref[...], xT, preferred_element_type=jnp.float32)
    h1 = jnp.maximum(h1 + b1_ref[...], 0.0)
    # fc2 + relu   (12,16) @ (16,T) -> (12,T)
    h2 = jnp.dot(w2_ref[...], h1, preferred_element_type=jnp.float32)
    h2 = jnp.maximum(h2 + b2_ref[...], 0.0)
    # output layer (no activation)   (3,12) @ (12,T) -> (3,T)
    out = jnp.dot(w3_ref[...], h2, preferred_element_type=jnp.float32)
    oT_ref[...] = (out + b3_ref[...]).astype(oT_ref.dtype)


def ann_forward(x, params, *, batch_tile=1024):
    """x: (B, 4) float32. Returns (B, 3) float32.

    batch_tile is the tuning knob (rows of batch per grid step); it is
    clamped/rounded to a multiple of 128 so the lane axis stays dense.
    Ragged batches are handled by zero-padding in the wrapper (padded
    columns are sliced off the output), so any B works.
    """
    w1, b1, w2, b2, w3, b3 = params
    B = x.shape[0]

    # Effective lane-aligned tile and padded batch.
    tile = max(_LANE, min(int(batch_tile), B))
    tile = -(-tile // _LANE) * _LANE          # round up to multiple of 128
    B_pad = -(-B // tile) * tile              # round B up to multiple of tile
    grid = (B_pad // tile,)

    xT = x.T                                  # (4, B)  batch -> lane axis
    if B_pad != B:
        xT = jnp.pad(xT, ((0, 0), (0, B_pad - B)))

    # Tiny constant weights/biases: give the kernel the full array each step
    # (constant block index -> the pipeliner does not re-fetch them).
    def full_spec(arr):
        return pl.BlockSpec(arr.shape, lambda i: (0,) * arr.ndim)

    # Advisory cost: memory-bound, ~584 flops and ~28 bytes of activations/row.
    param_bytes = 4 * (16 * 4 + 16 + 12 * 16 + 12 + 3 * 12 + 3)
    cost = pl.CostEstimate(
        flops=2 * B_pad * (4 * 16 + 16 * 12 + 12 * 3),
        transcendentals=0,
        bytes_accessed=B_pad * (4 + 3) * 4 + param_bytes,
    )

    outT = pl.pallas_call(
        _mlp_kernel,
        out_shape=jax.ShapeDtypeStruct((3, B_pad), jnp.float32),
        grid_spec=pltpu.PrefetchScalarGridSpec(
            num_scalar_prefetch=0,
            grid=grid,
            in_specs=[
                pl.BlockSpec((4, tile), lambda i: (0, i)),   # x^T tile (lane-dense)
                full_spec(w1), full_spec(b1),
                full_spec(w2), full_spec(b2),
                full_spec(w3), full_spec(b3),
            ],
            out_specs=pl.BlockSpec((3, tile), lambda i: (0, i)),  # lane-dense output
        ),
        compiler_params=pltpu.CompilerParams(
            dimension_semantics=("parallel",),   # shard batch tiles across TCs
        ),
        cost_estimate=cost,
    )(xT, w1, b1, w2, b2, w3, b3)

    return outT[:, :B].T                      # (B, 3)


def init_params(key):
    """Deterministic init mirroring nn.Linear ((out, in) weights, (out, 1) biases)."""
    dims = [(4, 16), (16, 12), (12, 3)]
    params = []
    keys = jax.random.split(key, 2 * len(dims))
    for idx, (fan_in, fan_out) in enumerate(dims):
        bound = 1.0 / jnp.sqrt(float(fan_in))  # PyTorch default U(-1/sqrt(in), 1/sqrt(in))
        w = jax.random.uniform(keys[2 * idx], (fan_out, fan_in),
                               minval=-bound, maxval=bound, dtype=jnp.float32)
        b = jax.random.uniform(keys[2 * idx + 1], (fan_out, 1),
                               minval=-bound, maxval=bound, dtype=jnp.float32)
        params += [w, b]
    return tuple(params)


def ann_reference(x, params):
    w1, b1, w2, b2, w3, b3 = params
    h1 = jnp.maximum(x @ w1.T + b1.T, 0.0)
    h2 = jnp.maximum(h1 @ w2.T + b2.T, 0.0)
    return h2 @ w3.T + b3.T


if __name__ == "__main__":
    key = jax.random.PRNGKey(0)
    pkey, xkey = jax.random.split(key)
    params = init_params(pkey)

    # Small batch (single padded tile).
    B = 8
    x = jax.random.normal(xkey, (B, 4), dtype=jnp.float32)
    out = jax.block_until_ready(ann_forward(x, params))
    ref = ann_reference(x, params)
    assert out.shape == (B, 3)
    assert jnp.allclose(out, ref, atol=1e-4, rtol=1e-4)

    # Ragged batch exercising a multi-step grid + padded tail tile.
    B2 = 300
    x2 = jax.random.normal(jax.random.PRNGKey(1), (B2, 4), dtype=jnp.float32)
    out2 = jax.block_until_ready(ann_forward(x2, params, batch_tile=128))
    ref2 = ann_reference(x2, params)
    assert out2.shape == (B2, 3)
    assert jnp.allclose(out2, ref2, atol=1e-4, rtol=1e-4)

    print("KERNEL_OK")
</pallas_src>

<mosaic_0001>
module attributes {stable_mosaic.version = 11 : i64} {
  func.func @_mlp_kernel(%arg0: i32, %arg1: memref<4x128xf32, #tpu.memory_space<vmem>>, %arg2: memref<16x4xf32, #tpu.memory_space<vmem>>, %arg3: memref<16x1xf32, #tpu.memory_space<vmem>>, %arg4: memref<12x16xf32, #tpu.memory_space<vmem>>, %arg5: memref<12x1xf32, #tpu.memory_space<vmem>>, %arg6: memref<3x12xf32, #tpu.memory_space<vmem>>, %arg7: memref<3x1xf32, #tpu.memory_space<vmem>>, %arg8: memref<3x128xf32, #tpu.memory_space<vmem>>) attributes {dimension_semantics = [#tpu.dimension_semantics<parallel>], iteration_bounds = array<i64: 1>, scalar_prefetch = 0 : i64, scratch_operands = 0 : i64, tpu.core_type = #tpu.core_type<tc>, window_params = [{transform_indices = @transform_0, window_bounds = array<i64: 4, 128>}, {pipeline_mode = #tpu.pipeline_mode<synchronous>, transform_indices = @transform_1, window_bounds = array<i64: 16, 4>}, {pipeline_mode = #tpu.pipeline_mode<synchronous>, transform_indices = @transform_2, window_bounds = array<i64: 16, 1>}, {pipeline_mode = #tpu.pipeline_mode<synchronous>, transform_indices = @transform_3, window_bounds = array<i64: 12, 16>}, {pipeline_mode = #tpu.pipeline_mode<synchronous>, transform_indices = @transform_4, window_bounds = array<i64: 12, 1>}, {pipeline_mode = #tpu.pipeline_mode<synchronous>, transform_indices = @transform_5, window_bounds = array<i64: 3, 12>}, {pipeline_mode = #tpu.pipeline_mode<synchronous>, transform_indices = @transform_6, window_bounds = array<i64: 3, 1>}, {transform_indices = @transform_7, window_bounds = array<i64: 3, 128>}]} {
    %c0 = arith.constant 0 : index
    %c0_0 = arith.constant 0 : index
    %0 = vector.load %arg1[%c0, %c0_0] : memref<4x128xf32, #tpu.memory_space<vmem>>, vector<4x128xf32>
    %c0_1 = arith.constant 0 : index
    %c0_2 = arith.constant 0 : index
    %1 = vector.load %arg2[%c0_1, %c0_2] : memref<16x4xf32, #tpu.memory_space<vmem>>, vector<16x4xf32>
    %cst = arith.constant dense<0.000000e+00> : vector<16x128xf32>
    %2 = tpu.matmul %1, %0, %cst {dimension_numbers = #tpu.dot_dimension_numbers<[1], [0], [0], [1], [0, 0, 1, 1], [], []>} : vector<16x4xf32>, vector<4x128xf32>, vector<16x128xf32> -> vector<16x128xf32>
    %c0_3 = arith.constant 0 : index
    %c0_4 = arith.constant 0 : index
    %3 = vector.load %arg3[%c0_3, %c0_4] : memref<16x1xf32, #tpu.memory_space<vmem>>, vector<16x1xf32>
    %4 = vector.broadcast %3 : vector<16x1xf32> to vector<16x128xf32>
    %5 = arith.addf %2, %4 : vector<16x128xf32>
    %cst_5 = arith.constant 0.000000e+00 : f32
    %6 = vector.broadcast %cst_5 : f32 to vector<16x128xf32>
    %7 = arith.maximumf %5, %6 : vector<16x128xf32>
    %c0_6 = arith.constant 0 : index
    %c0_7 = arith.constant 0 : index
    %8 = vector.load %arg4[%c0_6, %c0_7] : memref<12x16xf32, #tpu.memory_space<vmem>>, vector<12x16xf32>
    %cst_8 = arith.constant dense<0.000000e+00> : vector<12x128xf32>
    %9 = tpu.matmul %8, %7, %cst_8 {dimension_numbers = #tpu.dot_dimension_numbers<[1], [0], [0], [1], [0, 0, 1, 1], [], []>} : vector<12x16xf32>, vector<16x128xf32>, vector<12x128xf32> -> vector<12x128xf32>
    %c0_9 = arith.constant 0 : index
    %c0_10 = arith.constant 0 : index
    %10 = vector.load %arg5[%c0_9, %c0_10] : memref<12x1xf32, #tpu.memory_space<vmem>>, vector<12x1xf32>
    %11 = vector.broadcast %10 : vector<12x1xf32> to vector<12x128xf32>
    %12 = arith.addf %9, %11 : vector<12x128xf32>
    %cst_11 = arith.constant 0.000000e+00 : f32
    %13 = vector.broadcast %cst_11 : f32 to vector<12x128xf32>
    %14 = arith.maximumf %12, %13 : vector<12x128xf32>
    %c0_12 = arith.constant 0 : index
    %c0_13 = arith.constant 0 : index
    %15 = vector.load %arg6[%c0_12, %c0_13] : memref<3x12xf32, #tpu.memory_space<vmem>>, vector<3x12xf32>
    %cst_14 = arith.constant dense<0.000000e+00> : vector<3x128xf32>
    %16 = tpu.matmul %15, %14, %cst_14 {dimension_numbers = #tpu.dot_dimension_numbers<[1], [0], [0], [1], [0, 0, 1, 1], [], []>} : vector<3x12xf32>, vector<12x128xf32>, vector<3x128xf32> -> vector<3x128xf32>
    %c0_15 = arith.constant 0 : index
    %c0_16 = arith.constant 0 : index
    %17 = vector.load %arg7[%c0_15, %c0_16] : memref<3x1xf32, #tpu.memory_space<vmem>>, vector<3x1xf32>
    %18 = vector.broadcast %17 : vector<3x1xf32> to vector<3x128xf32>
    %19 = arith.addf %16, %18 : vector<3x128xf32>
    %c0_17 = arith.constant 0 : index
    %c0_18 = arith.constant 0 : index
    %20 = vector.load %arg8[%c0_17, %c0_18] : memref<3x128xf32, #tpu.memory_space<vmem>>, vector<3x128xf32>
    tpu.vector_store %arg8[%c0_17, %c0_18], %19 {strides = array<i32>} : memref<3x128xf32, #tpu.memory_space<vmem>>, vector<3x128xf32>,
    return
  }
  func.func @transform_0(%arg0: i32) -> (i32, i32) {
    %c0_i32 = arith.constant 0 : i32
    %c0_i32_0 = arith.constant 0 : i32
    return %c0_i32, %arg0 : i32, i32
  }
  func.func @transform_1(%arg0: i32) -> (i32, i32) {
    %c0_i32 = arith.constant 0 : i32
    %c0_i32_0 = arith.constant 0 : i32
    %c0_i32_1 = arith.constant 0 : i32
    return %c0_i32, %c0_i32_0 : i32, i32
  }
  func.func @transform_2(%arg0: i32) -> (i32, i32) {
    %c0_i32 = arith.constant 0 : i32
    %c0_i32_0 = arith.constant 0 : i32
    %c0_i32_1 = arith.constant 0 : i32
    return %c0_i32, %c0_i32_0 : i32, i32
  }
  func.func @transform_3(%arg0: i32) -> (i32, i32) {
    %c0_i32 = arith.constant 0 : i32
    %c0_i32_0 = arith.constant 0 : i32
    %c0_i32_1 = arith.constant 0 : i32
    return %c0_i32, %c0_i32_0 : i32, i32
  }
  func.func @transform_4(%arg0: i32) -> (i32, i32) {
    %c0_i32 = arith.constant 0 : i32
    %c0_i32_0 = arith.constant 0 : i32
    %c0_i32_1 = arith.constant 0 : i32
    return %c0_i32, %c0_i32_0 : i32, i32
  }
  func.func @transform_5(%arg0: i32) -> (i32, i32) {
    %c0_i32 = arith.constant 0 : i32
    %c0_i32_0 = arith.constant 0 : i32
    %c0_i32_1 = arith.constant 0 : i32
    return %c0_i32, %c0_i32_0 : i32, i32
  }
  func.func @transform_6(%arg0: i32) -> (i32, i32) {
    %c0_i32 = arith.constant 0 : i32
    %c0_i32_0 = arith.constant 0 : i32
    %c0_i32_1 = arith.constant 0 : i32
    return %c0_i32, %c0_i32_0 : i32, i32
  }
  func.func @transform_7(%arg0: i32) -> (i32, i32) {
    %c0_i32 = arith.constant 0 : i32
    %c0_i32_0 = arith.constant 0 : i32
    return %c0_i32, %arg0 : i32, i32
  }
}

</mosaic_0001>

<llo_original>
// kernel: tpu_custom_call.1
$region0: #{tpu_custom_call.1}
  #allocation0 [shape = 'u32[]', space=smem, size = 0x4, offset = 0x4, fixed_abs, tag = 'smem constant byte address 0x4 - core index']
  #allocation1 [shape = 'u32[144,128]{1,0:T(1,128)}', space=vmem, size = 0x12000, scoped, tag = 'internal scratch']
  %s0 = inlined_call_operand.vmem [shape: f32[4,128], index: 0, kind: input, shape index: {}]
  %s1 = inlined_call_operand.vmem [shape: f32[16,4], index: 1, kind: input, shape index: {}]
  %s2 = inlined_call_operand.vmem [shape: f32[16,1], index: 2, kind: input, shape index: {}]
  %s3 = inlined_call_operand.vmem [shape: f32[12,16], index: 3, kind: input, shape index: {}]
  %s4 = inlined_call_operand.vmem [shape: f32[12,1], index: 4, kind: input, shape index: {}]
  %s5 = inlined_call_operand.vmem [shape: f32[3,12], index: 5, kind: input, shape index: {}]
  %s6 = inlined_call_operand.vmem [shape: f32[3,1], index: 6, kind: input, shape index: {}]
  %s7 = inlined_call_operand.hbm [shape: f32[3,128], index: 7, kind: output, shape index: {}]
  %s8 = sld [smem:[#allocation0]]
  $region38: #{tpu_custom_call.1} parent=0
    _
  %s10 = ssub.s32 1, %s8
  %s11 = scalar_select 0, %s10, %s8
  $region1: #{tpu_custom_call.1} parent=0
    #allocation2 [shape = 'u8[2048]{0}', space=vmem, size = 0x800, scoped, tag = 'output window, operand 0, single buffered']
    #allocation3 [shape = 's32[1]{0}', space=sflag, size = 0x4, scoped, tag = 'scoped memory for tpu_custom_call.1']
    %12 = vsyncpa [#allocation3], 0
    // Predicated region
    $region2: #{tpu_custom_call.1} parent=1 // pred_check
      _
    $region3: #{tpu_custom_call.1} parent=1 // pred_check_branch
      %14 = sbr.rel (0) target = $region5
    $region4: #{tpu_custom_call.1} parent=1 // pred_region
      _
    $region5: #{tpu_custom_call.1} parent=1 // pred_fallthru
      _
    // Predicated region
    $region6: #{tpu_custom_call.1} parent=1 // pred_check
      _
    $region7: #{tpu_custom_call.1} parent=1 // pred_check_branch
      %16 = sbr.rel (0) target = $region9
    $region8: #{tpu_custom_call.1} parent=1 // pred_region
      _
    $region9: #{tpu_custom_call.1} parent=1 // pred_fallthru
      _
    // Predicated region
    $region10: #{tpu_custom_call.1} parent=1 // pred_check
      _
    $region11: #{tpu_custom_call.1} parent=1 // pred_check_branch
      %18 = sbr.rel (0) target = $region13
    $region12: #{tpu_custom_call.1} parent=1 // pred_region
      _
    $region13: #{tpu_custom_call.1} parent=1 // pred_fallthru
      _
    // Predicated region
    $region14: #{tpu_custom_call.1} parent=1 // pred_check
      _
    $region15: #{tpu_custom_call.1} parent=1 // pred_check_branch
      %20 = sbr.rel (0) target = $region17
    $region16: #{tpu_custom_call.1} parent=1 // pred_region
      _
    $region17: #{tpu_custom_call.1} parent=1 // pred_fallthru
      _
    // Predicated region
    $region18: #{tpu_custom_call.1} parent=1 // pred_check
      _
    $region19: #{tpu_custom_call.1} parent=1 // pred_check_branch
      %22 = sbr.rel (0) target = $region21
    $region20: #{tpu_custom_call.1} parent=1 // pred_region
      _
    $region21: #{tpu_custom_call.1} parent=1 // pred_fallthru
      _
    // Predicated region
    $region22: #{tpu_custom_call.1} parent=1 // pred_check
      _
    $region23: #{tpu_custom_call.1} parent=1 // pred_check_branch
      %24 = sbr.rel (0) target = $region25
    $region24: #{tpu_custom_call.1} parent=1 // pred_region
      _
    $region25: #{tpu_custom_call.1} parent=1 // pred_fallthru
      _
    // Predicated region
    $region26: #{tpu_custom_call.1} parent=1 // pred_check
      _
    $region27: #{tpu_custom_call.1} parent=1 // pred_check_branch
      %26 = sbr.rel (0) target = $region29
    $region28: #{tpu_custom_call.1} parent=1 // pred_region
      _
    $region29: #{tpu_custom_call.1} parent=1 // pred_fallthru
      _
    %v27 = vld [vmem:[%s0] sm:$0xf]
    %v28 = vld [vmem:[%s1] sm:$0xff]
    %v29 = vld [vmem:[%s1 + $0x8] sm:$0xff]
    %v30 = vld [vmem:[%s2] sm:$0xff]
    %v31 = vld [vmem:[%s2 + $0x8] sm:$0xff]
    %33 = vset.pattern.permute.xlu0 0
    %34 = vperm.xlu0 %33, %v30
    %v35 = vpop.permute.xlu0 %34
    %38 = vset.pattern.permute.xlu0 0
    %39 = vperm.xlu0 %38, %v31
    %v40 = vpop.permute.xlu0 %39
    %vm42 = vcmask 31744
    %v44 = vsel %vm42, %v28, 0
    %v47 = vsel %vm42, %v29, 0
    %vm49 = vcmask 1043456
    %v51 = vsel %vm49, %v27, 0
    %53 = vmatprep.subr.mxu0 0.0
    %54 = vmatpush1.msra.mxu0 %v51
    %55 = vmatprep.subr.mxu0 0.0
    %56 = vmatpush1.msra.mxu0 0.0
    %57 = vmatprep.subr.mxu0 0.0
    %58 = vmatpush1.msra.mxu0 0.0
    %59 = vmatprep.subr.mxu0 0.0
    %60 = vmatpush1.msra.mxu0 0.0
    %61 = vmatprep.subr.mxu0 0.0
    %62 = vmatpush1.msra.mxu0 0.0
    %63 = vmatprep.subr.mxu0 0.0
    %64 = vmatpush1.msra.mxu0 0.0
    %65 = vmatprep.subr.mxu0 0.0
    %66 = vmatpush1.msra.mxu0 0.0
    %67 = vmatprep.subr.mxu0 0.0
    %68 = vmatpush1.msra.mxu0 0.0
    %69 = vmatprep.subr.mxu0 0.0
    %70 = vmatpush1.msra.mxu0 0.0
    %71 = vmatprep.subr.mxu0 0.0
    %72 = vmatpush1.msra.mxu0 0.0
    %73 = vmatprep.subr.mxu0 0.0
    %74 = vmatpush1.msra.mxu0 0.0
    %75 = vmatprep.subr.mxu0 0.0
    %76 = vmatpush1.msra.mxu0 0.0
    %77 = vmatprep.subr.mxu0 0.0
    %78 = vmatpush1.msra.mxu0 0.0
    %79 = vmatprep.subr.mxu0 0.0
    %80 = vmatpush1.msra.mxu0 0.0
    %81 = vmatprep.subr.mxu0 0.0
    %82 = vmatpush1.msra.mxu0 0.0
    %83 = vmatprep.subr.mxu0 0.0
    %84 = vmatpush1.msra.mxu0 0.0
    %85 = vmatprep.subr.mxu0 0.0
    %86 = vmatpush1.msra.mxu0 0.0
    %87 = vmatprep.subr.mxu0 0.0
    %88 = vmatpush1.msra.mxu0 0.0
    %89 = vmatprep.subr.mxu0 0.0
    %90 = vmatpush1.msra.mxu0 0.0
    %91 = vmatprep.subr.mxu0 0.0
    %92 = vmatpush1.msra.mxu0 0.0
    %93 = vmatprep.subr.mxu0 0.0
    %94 = vmatpush1.msra.mxu0 0.0
    %95 = vmatprep.subr.mxu0 0.0
    %96 = vmatpush1.msra.mxu0 0.0
    %97 = vmatprep.subr.mxu0 0.0
    %98 = vmatpush1.msra.mxu0 0.0
    %99 = vmatprep.subr.mxu0 0.0
    %100 = vmatpush1.msra.mxu0 0.0
    %101 = vmatprep.subr.mxu0 0.0
    %102 = vmatpush1.msra.mxu0 0.0
    %103 = vmatprep.subr.mxu0 0.0
    %104 = vmatpush1.msra.mxu0 0.0
    %105 = vmatprep.subr.mxu0 0.0
    %106 = vmatpush1.msra.mxu0 0.0
    %107 = vmatprep.subr.mxu0 0.0
    %108 = vmatpush1.msra.mxu0 0.0
    %109 = vmatprep.subr.mxu0 0.0
    %110 = vmatpush1.msra.mxu0 0.0
    %111 = vmatprep.subr.mxu0 0.0
    %112 = vmatpush1.msra.mxu0 0.0
    %113 = vmatprep.subr.mxu0 0.0
    %114 = vmatpush1.msra.mxu0 0.0
    %115 = vmatprep.subr.mxu0 0.0
    %116 = vmatpush1.msra.mxu0 0.0
    %117 = vmatprep.mubr.f32.mxu0 0.0
    %118 = vmatmul.mubr.f32.gmra.mrb[0].mxu0 %v44
    %v119 = vpop.f32.mrb[0].mxu0
    %v120 = vadd.f32 %v35, %v119
    %v121 = vpop.f32.mrb[0].mxu0
    %122 = vmatprep.mubr.f32.mxu0 0.0
    %123 = vmatmul.mubr.f32.gmra.mrb[0].mxu0 %v47
    %v124 = vpop.f32.mrb[0].mxu0
    %v125 = vadd.f32 %v40, %v124
    %v126 = vpop.f32.mrb[0].mxu0
    %127 = vdwg.mxu0
    %v128 = vmax.f32 %v120, 0.0
    %v129 = vmax.f32 %v125, 0.0
    %v130 = vld [vmem:[%s3] sm:$0xff]
    %v131 = vld [vmem:[%s3 + $0x8] sm:$0xf]
    %v132 = vld [vmem:[%s4] sm:$0xff]
    %v133 = vld [vmem:[%s4 + $0x8] sm:$0xf]
    %135 = vset.pattern.permute.xlu0 0
    %136 = vperm.xlu0 %135, %v132
    %v137 = vpop.permute.xlu0 %136
    %140 = vset.pattern.permute.xlu0 0
    %141 = vperm.xlu0 %140, %v133
    %v142 = vpop.permute.xlu0 %141
    %vm144 = vcmask 130048
    %v146 = vsel %vm144, %v130, 0
    %v149 = vsel %vm144, %v131, 0
    %151 = vmatprep.subr.mxu0 0.0
    %152 = vmatpush1.msra.mxu0 %v128
    %153 = vmatprep.subr.mxu0 0.0
    %154 = vmatpush1.msra.mxu0 %v129
    %155 = vmatprep.subr.mxu0 0.0
    %156 = vmatpush1.msra.mxu0 0.0
    %157 = vmatprep.subr.mxu0 0.0
    %158 = vmatpush1.msra.mxu0 0.0
    %159 = vmatprep.subr.mxu0 0.0
    %160 = vmatpush1.msra.mxu0 0.0
    %161 = vmatprep.subr.mxu0 0.0
    %162 = vmatpush1.msra.mxu0 0.0
    %163 = vmatprep.subr.mxu0 0.0
    %164 = vmatpush1.msra.mxu0 0.0
    %165 = vmatprep.subr.mxu0 0.0
    %166 = vmatpush1.msra.mxu0 0.0
    %167 = vmatprep.subr.mxu0 0.0
    %168 = vmatpush1.msra.mxu0 0.0
    %169 = vmatprep.subr.mxu0 0.0
    %170 = vmatpush1.msra.mxu0 0.0
    %171 = vmatprep.subr.mxu0 0.0
    %172 = vmatpush1.msra.mxu0 0.0
    %173 = vmatprep.subr.mxu0 0.0
    %174 = vmatpush1.msra.mxu0 0.0
    %175 = vmatprep.subr.mxu0 0.0
    %176 = vmatpush1.msra.mxu0 0.0
    %177 = vmatprep.subr.mxu0 0.0
    %178 = vmatpush1.msra.mxu0 0.0
    %179 = vmatprep.subr.mxu0 0.0
    %180 = vmatpush1.msra.mxu0 0.0
    %181 = vmatprep.subr.mxu0 0.0
    %182 = vmatpush1.msra.mxu0 0.0
    %183 = vmatprep.subr.mxu0 0.0
    %184 = vmatpush1.msra.mxu0 0.0
    %185 = vmatprep.subr.mxu0 0.0
    %186 = vmatpush1.msra.mxu0 0.0
    %187 = vmatprep.subr.mxu0 0.0
    %188 = vmatpush1.msra.mxu0 0.0
    %189 = vmatprep.subr.mxu0 0.0
    %190 = vmatpush1.msra.mxu0 0.0
    %191 = vmatprep.subr.mxu0 0.0
    %192 = vmatpush1.msra.mxu0 0.0
    %193 = vmatprep.subr.mxu0 0.0
    %194 = vmatpush1.msra.mxu0 0.0
    %195 = vmatprep.subr.mxu0 0.0
    %196 = vmatpush1.msra.mxu0 0.0
    %197 = vmatprep.subr.mxu0 0.0
    %198 = vmatpush1.msra.mxu0 0.0
    %199 = vmatprep.subr.mxu0 0.0
    %200 = vmatpush1.msra.mxu0 0.0
    %201 = vmatprep.subr.mxu0 0.0
    %202 = vmatpush1.msra.mxu0 0.0
    %203 = vmatprep.subr.mxu0 0.0
    %204 = vmatpush1.msra.mxu0 0.0
    %205 = vmatprep.subr.mxu0 0.0
    %206 = vmatpush1.msra.mxu0 0.0
    %207 = vmatprep.subr.mxu0 0.0
    %208 = vmatpush1.msra.mxu0 0.0
    %209 = vmatprep.subr.mxu0 0.0
    %210 = vmatpush1.msra.mxu0 0.0
    %211 = vmatprep.subr.mxu0 0.0
    %212 = vmatpush1.msra.mxu0 0.0
    %213 = vmatprep.subr.mxu0 0.0
    %214 = vmatpush1.msra.mxu0 0.0
    %215 = vmatprep.mubr.f32.mxu0 0.0
    %216 = vmatmul.mubr.f32.gmra.mrb[0].mxu0 %v146
    %v217 = vpop.f32.mrb[0].mxu0
    %v218 = vadd.f32 %v137, %v217
    %v219 = vpop.f32.mrb[0].mxu0
    %220 = vmatprep.mubr.f32.mxu0 0.0
    %221 = vmatmul.mubr.f32.gmra.mrb[0].mxu0 %v149
    %v222 = vpop.f32.mrb[0].mxu0
    %v223 = vadd.f32 %v142, %v222
    %v224 = vpop.f32.mrb[0].mxu0
    %225 = vdwg.mxu0
    %v226 = vmax.f32 %v218, 0.0
    %v227 = vmax.f32 %v223, 0.0
    %v228 = vld [vmem:[%s5] sm:$0x7]
    %v229 = vld [vmem:[%s6] sm:$0x7]
    %231 = vset.pattern.permute.xlu0 0
    %232 = vperm.xlu0 %231, %v229
    %v233 = vpop.permute.xlu0 %232
    %vm235 = vcmask 97280
    %v237 = vsel %vm235, %v228, 0
    %v240 = vsel %vm49, %v227, 0
    %242 = vmatprep.subr.mxu0 0.0
    %243 = vmatpush1.msra.mxu0 %v226
    %244 = vmatprep.subr.mxu0 0.0
    %245 = vmatpush1.msra.mxu0 %v240
    %246 = vmatprep.subr.mxu0 0.0
    %247 = vmatpush1.msra.mxu0 0.0
    %248 = vmatprep.subr.mxu0 0.0
    %249 = vmatpush1.msra.mxu0 0.0
    %250 = vmatprep.subr.mxu0 0.0
    %251 = vmatpush1.msra.mxu0 0.0
    %252 = vmatprep.subr.mxu0 0.0
    %253 = vmatpush1.msra.mxu0 0.0
    %254 = vmatprep.subr.mxu0 0.0
    %255 = vmatpush1.msra.mxu0 0.0
    %256 = vmatprep.subr.mxu0 0.0
    %257 = vmatpush1.msra.mxu0 0.0
    %258 = vmatprep.subr.mxu0 0.0
    %259 = vmatpush1.msra.mxu0 0.0
    %260 = vmatprep.subr.mxu0 0.0
    %261 = vmatpush1.msra.mxu0 0.0
    %262 = vmatprep.subr.mxu0 0.0
    %263 = vmatpush1.msra.mxu0 0.0
    %264 = vmatprep.subr.mxu0 0.0
    %265 = vmatpush1.msra.mxu0 0.0
    %266 = vmatprep.subr.mxu0 0.0
    %267 = vmatpush1.msra.mxu0 0.0
    %268 = vmatprep.subr.mxu0 0.0
    %269 = vmatpush1.msra.mxu0 0.0
    %270 = vmatprep.subr.mxu0 0.0
    %271 = vmatpush1.msra.mxu0 0.0
    %272 = vmatprep.subr.mxu0 0.0
    %273 = vmatpush1.msra.mxu0 0.0
    %274 = vmatprep.subr.mxu0 0.0
    %275 = vmatpush1.msra.mxu0 0.0
    %276 = vmatprep.subr.mxu0 0.0
    %277 = vmatpush1.msra.mxu0 0.0
    %278 = vmatprep.subr.mxu0 0.0
    %279 = vmatpush1.msra.mxu0 0.0
    %280 = vmatprep.subr.mxu0 0.0
    %281 = vmatpush1.msra.mxu0 0.0
    %282 = vmatprep.subr.mxu0 0.0
    %283 = vmatpush1.msra.mxu0 0.0
    %284 = vmatprep.subr.mxu0 0.0
    %285 = vmatpush1.msra.mxu0 0.0
    %286 = vmatprep.subr.mxu0 0.0
    %287 = vmatpush1.msra.mxu0 0.0
    %288 = vmatprep.subr.mxu0 0.0
    %289 = vmatpush1.msra.mxu0 0.0
    %290 = vmatprep.subr.mxu0 0.0
    %291 = vmatpush1.msra.mxu0 0.0
    %292 = vmatprep.subr.mxu0 0.0
    %293 = vmatpush1.msra.mxu0 0.0
    %294 = vmatprep.subr.mxu0 0.0
    %295 = vmatpush1.msra.mxu0 0.0
    %296 = vmatprep.subr.mxu0 0.0
    %297 = vmatpush1.msra.mxu0 0.0
    %298 = vmatprep.subr.mxu0 0.0
    %299 = vmatpush1.msra.mxu0 0.0
    %300 = vmatprep.subr.mxu0 0.0
    %301 = vmatpush1.msra.mxu0 0.0
    %302 = vmatprep.subr.mxu0 0.0
    %303 = vmatpush1.msra.mxu0 0.0
    %304 = vmatprep.subr.mxu0 0.0
    %305 = vmatpush1.msra.mxu0 0.0
    %306 = vmatprep.mubr.f32.mxu0 0.0
    %307 = vmatmul.mubr.f32.gmra.mrb[0].mxu0 %v237
    %v308 = vpop.f32.mrb[0].mxu0
    %v309 = vadd.f32 %v233, %v308
    %v310 = vpop.f32.mrb[0].mxu0
    %311 = vdwg.mxu0
    %312 = vst [vmem:[#allocation2] sm:$0x7] %v309
    // Predicated region
    $region30: #{tpu_custom_call.1} parent=1 // pred_check
      _
    $region31: #{tpu_custom_call.1} parent=1 // pred_check_branch
      %314 = sbr.rel (0) target = $region33
    $region32: #{tpu_custom_call.1} parent=1 // pred_region
      %s316 = ssub.s32 64, 64
      %317 = vsyncadd [#allocation3], %s316
      %s319 = sshll.u32 [#allocation2], 4
      %s320 = int_to_ptr.vmem [resolvable:$true] %s319
      %322 = dma.vmem_to_hbm [thread:$0]  %s320, 64, %s7, [#allocation3]
    $region33: #{tpu_custom_call.1} parent=1 // pred_fallthru
      _
    // Predicated region
    $region34: #{tpu_custom_call.1} parent=1 // pred_check
      _
    $region35: #{tpu_custom_call.1} parent=1 // pred_check_branch
      %324 = sbr.rel (0) target = $region37
    $region36: #{tpu_custom_call.1} parent=1 // pred_region
      %325 = dma.done [#allocation3], 64
    $region37: #{tpu_custom_call.1} parent=1 // pred_fallthru
      _
    %326 = vsyncpa [#allocation3], 1

</llo_original>
